<compile_context>
chip_gen: v7x
topology: tpu7x:2x2x1
jax: 0.10.0
libtpu: 0.0.40
codegen_flags: <defaults>
</compile_context>

<pallas_src>
import functools

import jax
import jax.numpy as jnp
from jax.experimental import pallas as pl
from jax.experimental.pallas import tpu as pltpu


def _round_up(x, m):
    return (x + m - 1) // m * m


def _largest_divisor_le(n, k):
    k = max(1, min(n, k))
    while n % k:
        k -= 1
    return k


def _focal_ce_partial_kernel(x_ref, t_ref, sum_ref, cnt_ref, *,
                             hw, tile_l, n_tiles, ignore_index, has_tail):
    """One grid step: (bn, C, tile_l) logits + (bn, 1, tile_l) int32 targets ->
    partial CE sum and valid-pixel count splatted into a (1, 1, 128) block."""
    j = pl.program_id(1)

    x = x_ref[...].astype(jnp.float32)       # (bn, C, tile_l) — cast in-kernel
    t = t_ref[...]                           # (bn, 1, tile_l) int32

    # Numerically-stable CE over the class (sublane) axis.  x - m is computed
    # once and reused for both the exp and the one-hot target pick.
    m = jnp.max(x, axis=1, keepdims=True)                    # (bn, 1, tile_l)
    xm = x - m
    sumexp = jnp.sum(jnp.exp(xm), axis=1, keepdims=True)     # (bn, 1, tile_l)
    cls = jax.lax.broadcasted_iota(jnp.int32, x.shape, 1)    # class ids (sublanes)
    picked = jnp.sum(jnp.where(cls == t, xm, 0.0), axis=1, keepdims=True)
    ce_all = jnp.log(sumexp) - picked                        # (bn, 1, tile_l)

    valid_base = t != ignore_index

    def emit(valid):
        ce = jnp.where(valid, ce_all, 0.0)   # select blocks NaN/garbage columns
        sum_ref[...] = jnp.full(sum_ref.shape, jnp.sum(ce), dtype=jnp.float32)
        cnt_ref[...] = jnp.full(cnt_ref.shape,
                                jnp.sum(valid.astype(jnp.float32)),
                                dtype=jnp.float32)

    if has_tail:
        # Only the last pixel tile is ragged: mask cols >= HW there; every
        # other tile skips the extra iota / compare / and.
        @pl.when(j == n_tiles - 1)
        def _():
            col = j * tile_l + jax.lax.broadcasted_iota(jnp.int32, t.shape, 2)
            emit(valid_base & (col < hw))

        @pl.when(j != n_tiles - 1)
        def _():
            emit(valid_base)
    else:
        emit(valid_base)


def focal_loss_2d(logits_nchw, target_nhw, *, gamma=0.0, weight=None,
                  size_average=True, ignore_index=-1,
                  target_block_bytes=8 * 1024 * 1024):
    """Pallas implementation of FocalLoss2d.forward.

    logits_nchw: (N, C, H, W) float logits (f32 or bf16).
    target_nhw:  (N, H, W) integer class indices (ignore_index allowed).
    Returns a scalar float32 loss.
    """
    del weight  # Present in the module state but unused by the reference forward.

    N, C, H, W = logits_nchw.shape
    HW = H * W
    lane = 128

    # Free reshapes only — no transpose, no pad, no dtype upcast in HBM.
    x = logits_nchw.reshape(N, C, HW)
    t = target_nhw.reshape(N, 1, HW).astype(jnp.int32)

    itemsize = jnp.dtype(x.dtype).itemsize
    sub = max(8, 32 // itemsize)              # sublane tile: f32->8, bf16->16, i8->32
    padded_C = _round_up(C, sub)
    # Padded VMEM bytes one pixel column occupies (logits + int32 target padded
    # to 8 sublanes) — this is what actually counts against the block budget.
    bytes_per_col = padded_C * itemsize + 8 * 4

    img_bytes = bytes_per_col * _round_up(HW, lane)
    if img_bytes <= target_block_bytes:
        # Whole image fits under the budget: block over the batch axis instead
        # of capping the tile at HW (keeps each grid step near the byte budget).
        tile_l = HW
        n_tiles = 1
        bn = _largest_divisor_le(N, max(1, target_block_bytes // img_bytes))
    else:
        # Image larger than the budget: tile over pixels, one image at a time.
        bn = 1
        if HW <= lane:
            tile_l = HW
        else:
            ncols = max(1, target_block_bytes // (bytes_per_col * lane))
            tile_l = min(ncols * lane, (HW // lane) * lane)
        n_tiles = -(-HW // tile_l)            # ceil-div (ragged tail masked in-kernel)

    # v7x has 2 TensorCores: avoid a degenerate 1-step grid when there is work
    # to split (both grid axes are "parallel", so either axis can be sharded).
    if N * n_tiles >= 2 and (N // bn) * n_tiles < 2:
        bn = _largest_divisor_le(N, max(1, N // 2))

    nb_blocks = N // bn
    G = nb_blocks * n_tiles
    has_tail = (HW % tile_l) != 0

    # Double-buffered padded footprint (logits + targets + two tiny output
    # blocks) with headroom; 32 MiB floor keeps v5e happy, 48 MiB cap stays
    # comfortably under v7x's 64 MiB physical VMEM.
    logits_blk = bn * padded_C * _round_up(tile_l, lane) * itemsize
    target_blk = bn * 8 * _round_up(tile_l, lane) * 4
    out_blk = 2 * 8 * lane * 4
    vmem_limit = int(min(48 * 1024 * 1024,
                         max(32 * 1024 * 1024,
                             2 * (logits_blk + target_blk + out_blk) + (4 << 20))))

    kernel = functools.partial(
        _focal_ce_partial_kernel, hw=HW, tile_l=tile_l, n_tiles=n_tiles,
        ignore_index=ignore_index, has_tail=has_tail)

    cost = pl.CostEstimate(
        flops=8 * N * HW * C,
        transcendentals=N * HW * (C + 1),
        bytes_accessed=N * C * HW * itemsize + N * HW * 4 + 2 * G * lane * 4,
    )

    sum_part, cnt_part = pl.pallas_call(
        kernel,
        out_shape=(jax.ShapeDtypeStruct((G, 1, 128), jnp.float32),
                   jax.ShapeDtypeStruct((G, 1, 128), jnp.float32)),
        grid_spec=pltpu.PrefetchScalarGridSpec(
            num_scalar_prefetch=0,
            grid=(nb_blocks, n_tiles),
            in_specs=[
                # classes on sublanes, pixels on lanes (lane-dense), bn images per step
                pl.BlockSpec((bn, C, tile_l), lambda nb, j: (nb, 0, j)),
                pl.BlockSpec((bn, 1, tile_l), lambda nb, j: (nb, 0, j)),
            ],
            out_specs=[
                pl.BlockSpec((1, 1, 128), lambda nb, j: (nb * n_tiles + j, 0, 0)),
                pl.BlockSpec((1, 1, 128), lambda nb, j: (nb * n_tiles + j, 0, 0)),
            ],
        ),
        compiler_params=pltpu.CompilerParams(
            # No carried accumulator -> both axes parallel (v7x dual TC).
            dimension_semantics=("parallel", "parallel"),
            vmem_limit_bytes=vmem_limit,
        ),
        cost_estimate=cost,
    )(x, t)

    # Final tiny reduction + focal scalar math in plain JAX.
    total_sum = jnp.sum(sum_part[:, 0, 0])
    total_cnt = jnp.sum(cnt_part[:, 0, 0])
    # NB: all-ignored batch -> 0/0 = NaN, matching F.cross_entropy(mean).
    mean_ce = total_sum / total_cnt
    # Gamma applies to the batch-mean CE, exactly as in the PyTorch reference
    # (NOT canonical per-pixel focal weighting) — intentional.
    logpt = -mean_ce
    pt = jnp.exp(logpt)
    loss = -(1.0 - pt) ** gamma * logpt
    # size_average True/False both reduce a scalar -> identical.
    return loss


def _reference_focal_loss(logits_nchw, target_nhw, *, gamma, ignore_index):
    """Pure-JAX reference mirroring the PyTorch semantics."""
    N, C, H, W = logits_nchw.shape
    x = jnp.transpose(logits_nchw, (0, 2, 3, 1)).reshape(-1, C).astype(jnp.float32)
    t = target_nhw.reshape(-1).astype(jnp.int32)
    logp = jax.nn.log_softmax(x, axis=-1)
    picked = jnp.take_along_axis(logp, jnp.clip(t, 0, C - 1)[:, None],
                                 axis=-1)[:, 0]
    valid = t != ignore_index
    ce = -picked
    mean_ce = jnp.sum(jnp.where(valid, ce, 0.0)) / jnp.sum(valid)
    logpt = -mean_ce
    pt = jnp.exp(logpt)
    return -(1.0 - pt) ** gamma * logpt


if __name__ == "__main__":
    key = jax.random.PRNGKey(0)

    def run_case(n, c, h, w, gamma, ignore_index, block_bytes, case_key):
        k1, k2 = jax.random.split(case_key)
        logits = jax.random.normal(k1, (n, c, h, w), dtype=jnp.float32)
        target = jax.random.randint(k2, (n, h, w), 0, c, dtype=jnp.int32)
        # Sprinkle a few ignored pixels to exercise the ignore_index masking.
        target = target.at[0, 0, : min(4, w)].set(ignore_index)
        # "Class weights" mirror the module's __init__ state; unused in forward.
        class_weight = jnp.linspace(0.5, 1.5, c, dtype=jnp.float32)
        loss = focal_loss_2d(logits, target, gamma=gamma, weight=class_weight,
                             size_average=True, ignore_index=ignore_index,
                             target_block_bytes=block_bytes)
        loss = jax.block_until_ready(loss)
        ref = _reference_focal_loss(logits, target, gamma=gamma,
                                    ignore_index=ignore_index)
        assert jnp.allclose(loss, ref, rtol=1e-5, atol=1e-5), \
            ((n, c, h, w), loss, ref)

    k0, k1, k2 = jax.random.split(key, 3)
    # Small case matching the module's typical use (batch=2, 4 classes, 16x16).
    run_case(2, 4, 16, 16, gamma=2.0, ignore_index=-1,
             block_bytes=8 * 1024 * 1024, case_key=k0)
    # Batch-blocked path (bn > 1): several images per grid step.
    run_case(8, 4, 16, 16, gamma=0.0, ignore_index=-1,
             block_bytes=8 * 1024 * 1024, case_key=k1)
    # Pixel-tiled path with a ragged last tile (HW=289, tile=256) — exercises
    # the pl.when tail-mask branch and Pallas block padding.
    run_case(2, 4, 17, 17, gamma=2.0, ignore_index=-1,
             block_bytes=16 * 1024, case_key=k2)

    print("KERNEL_OK")
</pallas_src>

<mosaic_0001>
module attributes {stable_mosaic.version = 11 : i64} {
  func.func @_focal_ce_partial_kernel(%arg0: i32, %arg1: i32, %arg2: memref<1x4x256xf32, #tpu.memory_space<vmem>>, %arg3: memref<1x1x256xi32, #tpu.memory_space<vmem>>, %arg4: memref<1x1x128xf32, #tpu.memory_space<vmem>>, %arg5: memref<1x1x128xf32, #tpu.memory_space<vmem>>) attributes {dimension_semantics = [#tpu.dimension_semantics<parallel>, #tpu.dimension_semantics<parallel>], iteration_bounds = array<i64: 2, 1>, scalar_prefetch = 0 : i64, scratch_operands = 0 : i64, tpu.core_type = #tpu.core_type<tc>, window_params = [{transform_indices = @transform_0, window_bounds = array<i64: 1, 4, 256>}, {transform_indices = @transform_1, window_bounds = array<i64: 1, 1, 256>}, {transform_indices = @transform_2, window_bounds = array<i64: 1, 1, 128>}, {transform_indices = @transform_3, window_bounds = array<i64: 1, 1, 128>}]} {
    %c0 = arith.constant 0 : index
    %c0_0 = arith.constant 0 : index
    %c0_1 = arith.constant 0 : index
    %0 = vector.load %arg2[%c0, %c0_0, %c0_1] : memref<1x4x256xf32, #tpu.memory_space<vmem>>, vector<1x4x256xf32>
    %c0_2 = arith.constant 0 : index
    %c0_3 = arith.constant 0 : index
    %c0_4 = arith.constant 0 : index
    %1 = vector.load %arg3[%c0_2, %c0_3, %c0_4] : memref<1x1x256xi32, #tpu.memory_space<vmem>>, vector<1x1x256xi32>
    %cst = arith.constant dense<0xFF800000> : vector<1x256xf32>
    %2 = vector.multi_reduction <maximumf>, %0, %cst [1] : vector<1x4x256xf32> to vector<1x256xf32>
    %3 = vector.shape_cast %2 : vector<1x256xf32> to vector<1x1x256xf32>
    %4 = vector.broadcast %3 : vector<1x1x256xf32> to vector<1x4x256xf32>
    %5 = arith.subf %0, %4 : vector<1x4x256xf32>
    %6 = math.exp %5 : vector<1x4x256xf32>
    %cst_5 = arith.constant dense<0.000000e+00> : vector<1x256xf32>
    %7 = vector.multi_reduction <add>, %6, %cst_5 [1] : vector<1x4x256xf32> to vector<1x256xf32>
    %8 = vector.shape_cast %7 : vector<1x256xf32> to vector<1x1x256xf32>
    %9 = tpu.iota {dimensions = array<i32: 1>} : vector<1x4x256xi32>
    %10 = vector.broadcast %1 : vector<1x1x256xi32> to vector<1x4x256xi32>
    %11 = arith.cmpi eq, %9, %10 : vector<1x4x256xi32>
    %cst_6 = arith.constant 0.000000e+00 : f32
    %12 = vector.broadcast %cst_6 : f32 to vector<1x4x256xf32>
    %13 = arith.select %11, %5, %12 : vector<1x4x256xi1>, vector<1x4x256xf32>
    %cst_7 = arith.constant dense<0.000000e+00> : vector<1x256xf32>
    %14 = vector.multi_reduction <add>, %13, %cst_7 [1] : vector<1x4x256xf32> to vector<1x256xf32>
    %15 = vector.shape_cast %14 : vector<1x256xf32> to vector<1x1x256xf32>
    %16 = math.log %8 : vector<1x1x256xf32>
    %17 = arith.subf %16, %15 : vector<1x1x256xf32>
    %c-1_i32 = arith.constant -1 : i32
    %18 = vector.broadcast %c-1_i32 : i32 to vector<1x1x256xi32>
    %19 = arith.cmpi ne, %1, %18 : vector<1x1x256xi32>
    %cst_8 = arith.constant 0.000000e+00 : f32
    %20 = vector.broadcast %cst_8 : f32 to vector<1x1x256xf32>
    %21 = arith.select %19, %17, %20 : vector<1x1x256xi1>, vector<1x1x256xf32>
    %22 = vector.shape_cast %21 : vector<1x1x256xf32> to vector<1x1x1x256xf32>
    %cst_9 = arith.constant dense<0.000000e+00> : vector<1xf32>
    %23 = vector.multi_reduction <add>, %22, %cst_9 [1, 2, 3] : vector<1x1x1x256xf32> to vector<1xf32>
    %24 = vector.shape_cast %23 : vector<1xf32> to vector<1x1x1x1xf32>
    %25 = vector.extract %24[0, 0, 0, 0] : f32 from vector<1x1x1x1xf32>
    %26 = vector.broadcast %25 : f32 to vector<1x1x128xf32>
    %c0_10 = arith.constant 0 : index
    %c0_11 = arith.constant 0 : index
    %c0_12 = arith.constant 0 : index
    %27 = vector.load %arg4[%c0_10, %c0_11, %c0_12] : memref<1x1x128xf32, #tpu.memory_space<vmem>>, vector<1x1x128xf32>
    tpu.vector_store %arg4[%c0_10, %c0_11, %c0_12], %26 {strides = array<i32>} : memref<1x1x128xf32, #tpu.memory_space<vmem>>, vector<1x1x128xf32>,
    %28 = arith.extui %19 : vector<1x1x256xi1> to vector<1x1x256xi32>
    %29 = arith.sitofp %28 : vector<1x1x256xi32> to vector<1x1x256xf32>
    %30 = vector.shape_cast %29 : vector<1x1x256xf32> to vector<1x1x1x256xf32>
    %cst_13 = arith.constant dense<0.000000e+00> : vector<1xf32>
    %31 = vector.multi_reduction <add>, %30, %cst_13 [1, 2, 3] : vector<1x1x1x256xf32> to vector<1xf32>
    %32 = vector.shape_cast %31 : vector<1xf32> to vector<1x1x1x1xf32>
    %33 = vector.extract %32[0, 0, 0, 0] : f32 from vector<1x1x1x1xf32>
    %34 = vector.broadcast %33 : f32 to vector<1x1x128xf32>
    %c0_14 = arith.constant 0 : index
    %c0_15 = arith.constant 0 : index
    %c0_16 = arith.constant 0 : index
    %35 = vector.load %arg5[%c0_14, %c0_15, %c0_16] : memref<1x1x128xf32, #tpu.memory_space<vmem>>, vector<1x1x128xf32>
    tpu.vector_store %arg5[%c0_14, %c0_15, %c0_16], %34 {strides = array<i32>} : memref<1x1x128xf32, #tpu.memory_space<vmem>>, vector<1x1x128xf32>,
    return
  }
  func.func @transform_0(%arg0: i32, %arg1: i32) -> (i32, i32, i32) {
    %c0_i32 = arith.constant 0 : i32
    %c0_i32_0 = arith.constant 0 : i32
    return %arg0, %c0_i32, %arg1 : i32, i32, i32
  }
  func.func @transform_1(%arg0: i32, %arg1: i32) -> (i32, i32, i32) {
    %c0_i32 = arith.constant 0 : i32
    %c0_i32_0 = arith.constant 0 : i32
    return %arg0, %c0_i32, %arg1 : i32, i32, i32
  }
  func.func @transform_2(%arg0: i32, %arg1: i32) -> (i32, i32, i32) {
    %c1_i32 = arith.constant 1 : i32
    %0 = arith.muli %arg0, %c1_i32 : i32
    %1 = arith.addi %0, %arg1 : i32
    %c0_i32 = arith.constant 0 : i32
    %c0_i32_0 = arith.constant 0 : i32
    %c0_i32_1 = arith.constant 0 : i32
    return %1, %c0_i32, %c0_i32_0 : i32, i32, i32
  }
  func.func @transform_3(%arg0: i32, %arg1: i32) -> (i32, i32, i32) {
    %c1_i32 = arith.constant 1 : i32
    %0 = arith.muli %arg0, %c1_i32 : i32
    %1 = arith.addi %0, %arg1 : i32
    %c0_i32 = arith.constant 0 : i32
    %c0_i32_0 = arith.constant 0 : i32
    %c0_i32_1 = arith.constant 0 : i32
    return %1, %c0_i32, %c0_i32_0 : i32, i32, i32
  }
}

</mosaic_0001>

<llo_original>
// kernel: tpu_custom_call.1
$region0: #{tpu_custom_call.1}
  #allocation0 [shape = 'u32[]', space=smem, size = 0x4, offset = 0x4, fixed_abs, tag = 'smem constant byte address 0x4 - core index']
  #allocation1 [shape = 'u32[144,128]{1,0:T(1,128)}', space=vmem, size = 0x12000, scoped, tag = 'internal scratch']
  %s0 = inlined_call_operand.hbm [shape: f32[2,4,256], index: 0, kind: input, shape index: {}]
  %s1 = inlined_call_operand.hbm [shape: s32[2,1,256], index: 1, kind: input, shape index: {}]
  %s2 = inlined_call_operand.hbm [shape: f32[2,1,128], index: 2, kind: output, shape index: {0}]
  %s3 = inlined_call_operand.hbm [shape: f32[2,1,128], index: 3, kind: output, shape index: {1}]
  %4 = xla_tuple %s2, %s3
  %s5 = sld [smem:[#allocation0]]
  $region57: #{tpu_custom_call.1} parent=0
    _
  %s7 = ssub.s32 1, %s5
  %s8 = scalar_select 0, %s7, %s5
  $region1: #{tpu_custom_call.1} parent=0
    #allocation2 [shape = 'u8[8192]{0}', space=vmem, size = 0x2000, scoped, tag = 'input window, operand 0']
    #allocation3 [shape = 's32[2]{0}', space=sflag, size = 0x8, scoped, tag = 'scoped memory for tpu_custom_call.1']
    #allocation4 [shape = 's32[2]{0}', space=sflag, size = 0x8, scoped, tag = 'scoped memory for tpu_custom_call.1']
    #allocation5 [shape = 'u8[2048]{0}', space=vmem, size = 0x800, scoped, tag = 'input window, operand 1']
    #allocation6 [shape = 's32[2]{0}', space=sflag, size = 0x8, scoped, tag = 'scoped memory for tpu_custom_call.1']
    #allocation7 [shape = 'u8[1024]{0}', space=vmem, size = 0x400, scoped, tag = 'output window, operand 0']
    #allocation8 [shape = 'u8[1024]{0}', space=vmem, size = 0x400, scoped, tag = 'output window, operand 1']
    #allocation9 [shape = 's32[2]{0}', space=sflag, size = 0x8, scoped, tag = 'scoped memory for tpu_custom_call.1']
    %9 = vsyncpa [#allocation3], 0
    %s10 = scalar_lea.sflag [#allocation3], 1
    %11 = vsyncpa %s10, 0
    %12 = vsyncpa [#allocation6], 0
    %s13 = scalar_lea.sflag [#allocation6], 1
    %14 = vsyncpa %s13, 0
    %15 = vsyncpa [#allocation4], 0
    %s16 = scalar_lea.sflag [#allocation4], 1
    %17 = vsyncpa %s16, 0
    %18 = vsyncpa [#allocation9], 0
    %s19 = scalar_lea.sflag [#allocation9], 1
    %20 = vsyncpa %s19, 0
    loop: start=0, step=1, limit=4
    $region2: #{tpu_custom_call.1} parent=1 // loop_pre_header
      _
    $region3: #{tpu_custom_call.1} parent=1 // loop_header
      %s22 = sphi 0, %s26
      %p23 = scmp.ge.s32.totalorder %s22, 4
      %s29 = sphi 0, %s41
      %s30 = sphi 0, %s37
      %s31 = sphi 0, %s29
      %s32 = sphi 0, %s30
      %s33 = sphi 0, %s31
      %s34 = sphi 0, %s32
      %s46 = sphi 0, %s48
      %s49 = sphi 0, %s46
      %s50 = sphi 0, %s49
      %s66 = sphi 0, %s50
      %s74 = sphi 0, %s76
      %s77 = sphi 0, %s74
      %s78 = sphi 0, %s77
      %s94 = sphi 0, %s78
      %s102 = sphi 0, %s104
      %s105 = sphi 0, %s102
      %s106 = sphi 0, %s105
      %s122 = sphi 0, %s106
      %s130 = sphi 0, %s132
      %s133 = sphi 0, %s130
      %s134 = sphi 0, %s133
      %s150 = sphi 0, %s134
    $region4: #{tpu_custom_call.1} parent=1 // loop_header_branch
      %25 = sbr.rel (%p23) target = $region8
    $region5: #{tpu_custom_call.1} parent=1 // loop_body
      %s27 = ssub.s32 %s22, 1
      %s28 = ssub.s32 %s22, 2
      %s35 = sadd.s32 1, %s30
      %p36 = scmp.ge.s32.totalorder %s35, 1
      %s37 = scalar_select %p36, 0, %s35
      %s38 = sadd.s32 1, %s29
      %s39 = scalar_select %p36, %s38, %s29
      %p40 = scmp.ge.s32.totalorder %s39, 2
      %s41 = scalar_select %p40, 0, %s39
      %s42 = ssub.s32 %s29, %s41
      %s43 = ssub.s32 %s30, %s37
      %s44 = sor.u32 %s42, %s43
      %p45 = scmp.eq.s32.totalorder %s44, 0
      %s47 = sadd.s32 %s46, 1
      %s48 = scalar_select %p45, %s46, %s47
      %p51 = pneg %p45
      %p52 = scmp.eq.s32.totalorder %s22, 1
      %p53 = por %p51, %p52
      %p54 = scmp.ne.s32.totalorder %s46, %s49
      %p55 = scmp.eq.s32.totalorder %s22, 0
      %p56 = por %p54, %p55
      %p57 = scmp.ne.s32.totalorder %s46, %s49
      %p58 = scmp.eq.s32.totalorder %s27, 1
      %p59 = por %p57, %p58
      %p60 = scmp.ne.s32.totalorder %s49, %s50
      %p61 = scmp.eq.s32.totalorder %s27, 0
      %p62 = por %p60, %p61
      %p63 = scmp.ne.s32.totalorder %s49, %s50
      %p64 = scmp.eq.s32.totalorder %s28, 1
      %p65 = por %p63, %p64
      %p67 = scmp.ne.s32.totalorder %s50, %s66
      %p68 = scmp.eq.s32.totalorder %s28, 0
      %p69 = por %p67, %p68
      %s70 = ssub.s32 %s29, %s41
      %s71 = ssub.s32 %s30, %s37
      %s72 = sor.u32 %s70, %s71
      %p73 = scmp.eq.s32.totalorder %s72, 0
      %s75 = sadd.s32 %s74, 1
      %s76 = scalar_select %p73, %s74, %s75
      %p79 = pneg %p73
      %p80 = scmp.eq.s32.totalorder %s22, 1
      %p81 = por %p79, %p80
      %p82 = scmp.ne.s32.totalorder %s74, %s77
      %p83 = scmp.eq.s32.totalorder %s22, 0
      %p84 = por %p82, %p83
      %p85 = scmp.ne.s32.totalorder %s74, %s77
      %p86 = scmp.eq.s32.totalorder %s27, 1
      %p87 = por %p85, %p86
      %p88 = scmp.ne.s32.totalorder %s77, %s78
      %p89 = scmp.eq.s32.totalorder %s27, 0
      %p90 = por %p88, %p89
      %p91 = scmp.ne.s32.totalorder %s77, %s78
      %p92 = scmp.eq.s32.totalorder %s28, 1
      %p93 = por %p91, %p92
      %p95 = scmp.ne.s32.totalorder %s78, %s94
      %p96 = scmp.eq.s32.totalorder %s28, 0
      %p97 = por %p95, %p96
      %s98 = sadd.s32 %s29, %s30
      %s99 = sadd.s32 %s41, %s37
      %s100 = ssub.s32 %s98, %s99
      %p101 = scmp.eq.s32.totalorder %s100, 0
      %s103 = sadd.s32 %s102, 1
      %s104 = scalar_select %p101, %s102, %s103
      %p107 = pneg %p101
      %p108 = scmp.eq.s32.totalorder %s22, 1
      %p109 = por %p107, %p108
      %p110 = scmp.ne.s32.totalorder %s102, %s105
      %p111 = scmp.eq.s32.totalorder %s22, 0
      %p112 = por %p110, %p111
      %p113 = scmp.ne.s32.totalorder %s102, %s105
      %p114 = scmp.eq.s32.totalorder %s27, 1
      %p115 = por %p113, %p114
      %p116 = scmp.ne.s32.totalorder %s105, %s106
      %p117 = scmp.eq.s32.totalorder %s27, 0
      %p118 = por %p116, %p117
      %p119 = scmp.ne.s32.totalorder %s105, %s106
      %p120 = scmp.eq.s32.totalorder %s28, 1
      %p121 = por %p119, %p120
      %p123 = scmp.ne.s32.totalorder %s106, %s122
      %p124 = scmp.eq.s32.totalorder %s28, 0
      %p125 = por %p123, %p124
      %s126 = sadd.s32 %s29, %s30
      %s127 = sadd.s32 %s41, %s37
      %s128 = ssub.s32 %s126, %s127
      %p129 = scmp.eq.s32.totalorder %s128, 0
      %s131 = sadd.s32 %s130, 1
      %s132 = scalar_select %p129, %s130, %s131
      %p135 = pneg %p129
      %p136 = scmp.eq.s32.totalorder %s22, 1
      %p137 = por %p135, %p136
      %p138 = scmp.ne.s32.totalorder %s130, %s133
      %p139 = scmp.eq.s32.totalorder %s22, 0
      %p140 = por %p138, %p139
      %p141 = scmp.ne.s32.totalorder %s130, %s133
      %p142 = scmp.eq.s32.totalorder %s27, 1
      %p143 = por %p141, %p142
      %p144 = scmp.ne.s32.totalorder %s133, %s134
      %p145 = scmp.eq.s32.totalorder %s27, 0
      %p146 = por %p144, %p145
      %p147 = scmp.ne.s32.totalorder %s133, %s134
      %p148 = scmp.eq.s32.totalorder %s28, 1
      %p149 = por %p147, %p148
      %p151 = scmp.ne.s32.totalorder %s134, %s150
      %p152 = scmp.eq.s32.totalorder %s28, 0
      %p153 = por %p151, %p152
      %p154 = scmp.le.s32.totalorder 1, %s22
      %p155 = scmp.lt.s32.totalorder %s22, 3
      %p156 = pnand %p154, %p155
      %p157 = pneg %p156
      // Predicated region
      $region9: #{tpu_custom_call.1} parent=5 // pred_check
        _
      $region10: #{tpu_custom_call.1} parent=5 // pred_check_branch
        %159 = sbr.rel (%p156) target = $region12
      $region11: #{tpu_custom_call.1} parent=5 // pred_region
        %s160 = ssub.s32 %s22, 1
      $region12: #{tpu_custom_call.1} parent=5 // pred_fallthru
        _
      %p161 = scmp.lt.s32.totalorder %s22, 2
      // Predicated region
      $region13: #{tpu_custom_call.1} parent=5 // pred_check
        %p162 = pneg %p161
      $region14: #{tpu_custom_call.1} parent=5 // pred_check_branch
        %164 = sbr.rel (%p162) target = $region16
      $region15: #{tpu_custom_call.1} parent=5 // pred_region
        // Predicated region
        $region17: #{tpu_custom_call.1} parent=15 // pred_check
          %p165 = pneg %p56
        $region18: #{tpu_custom_call.1} parent=15 // pred_check_branch
          %167 = sbr.rel (%p165) target = $region20
        $region19: #{tpu_custom_call.1} parent=15 // pred_region
          %s168 = sand.u32 %s46, 1
          %s169 = scalar_lea.sflag [#allocation3], %s168
          %s170 = sand.u32 %s46, 1
          %s171 = smul.addr %s170, 8
          %s172 = scalar_lea.vmem [#allocation2], %s171
          %s173 = smul.u32 2, %s30
          %s175 = ssub.s32 128, 128
          %176 = vsyncadd %s169, %s175
          %s177 = smul.addr %s29, 2
          %s178 = sadd.s32 %s173, %s177
          %s179 = smul.addr %s178, 64
          %s180 = scalar_lea.hbm %s0, %s179
          %s182 = sshll.u32 %s172, 4
          %s183 = int_to_ptr.vmem [resolvable:$true] %s182
          %185 = dma.hbm_to_vmem [thread:$0]  %s180, 128, %s183, %s169
        $region20: #{tpu_custom_call.1} parent=15 // pred_fallthru
          _
        // Predicated region
        $region21: #{tpu_custom_call.1} parent=15 // pred_check
          %p186 = pneg %p84
        $region22: #{tpu_custom_call.1} parent=15 // pred_check_branch
          %188 = sbr.rel (%p186) target = $region24
        $region23: #{tpu_custom_call.1} parent=15 // pred_region
          %s189 = sand.u32 %s74, 1
          %s190 = scalar_lea.sflag [#allocation6], %s189
          %s191 = sand.u32 %s74, 1
          %s192 = smul.addr %s191, 2
          %s193 = scalar_lea.vmem [#allocation5], %s192
          %s194 = smul.u32 2, %s30
          %s196 = ssub.s32 32, 32
          %197 = vsyncadd %s190, %s196
          %s198 = smul.addr %s29, 2
          %s199 = sadd.s32 %s194, %s198
          %s200 = smul.addr %s199, 16
          %s201 = scalar_lea.hbm %s1, %s200
          %s203 = sshll.u32 %s193, 4
          %s204 = int_to_ptr.vmem [resolvable:$true] %s203
          %206 = dma.hbm_to_vmem [thread:$0]  %s201, 32, %s204, %s190
        $region24: #{tpu_custom_call.1} parent=15 // pred_fallthru
          _
      $region16: #{tpu_custom_call.1} parent=5 // pred_fallthru
        _
      %p207 = scmp.le.s32.totalorder 1, %s22
      %p208 = scmp.lt.s32.totalorder %s22, 3
      %p209 = pnand %p207, %p208
      %p210 = pneg %p209
      // Predicated region
      $region25: #{tpu_custom_call.1} parent=5 // pred_check
        _
      $region26: #{tpu_custom_call.1} parent=5 // pred_check_branch
        %212 = sbr.rel (%p209) target = $region28
      $region27: #{tpu_custom_call.1} parent=5 // pred_region
        %s213 = ssub.s32 %s22, 1
        %s214 = sand.u32 %s49, 1
        %s215 = scalar_lea.sflag [#allocation3], %s214
        %s216 = sand.u32 %s49, 1
        %s217 = smul.addr %s216, 8
        %s218 = scalar_lea.vmem [#allocation2], %s217
        // Predicated region
        $region29: #{tpu_custom_call.1} parent=27 // pred_check
          %p219 = pneg %p62
        $region30: #{tpu_custom_call.1} parent=27 // pred_check_branch
          %221 = sbr.rel (%p219) target = $region32
        $region31: #{tpu_custom_call.1} parent=27 // pred_region
          %222 = dma.done %s215, 128
        $region32: #{tpu_custom_call.1} parent=27 // pred_fallthru
          _
        %s223 = sand.u32 %s77, 1
        %s224 = scalar_lea.sflag [#allocation6], %s223
        %s225 = sand.u32 %s77, 1
        %s226 = smul.addr %s225, 2
        %s227 = scalar_lea.vmem [#allocation5], %s226
        // Predicated region
        $region33: #{tpu_custom_call.1} parent=27 // pred_check
          %p228 = pneg %p90
        $region34: #{tpu_custom_call.1} parent=27 // pred_check_branch
          %230 = sbr.rel (%p228) target = $region36
        $region35: #{tpu_custom_call.1} parent=27 // pred_region
          %231 = dma.done %s224, 32
        $region36: #{tpu_custom_call.1} parent=27 // pred_fallthru
          _
        %s232 = sand.u32 %s49, 1
        %s233 = scalar_lea.sflag [#allocation3], %s232
        %s234 = sand.u32 %s49, 1
        %s235 = smul.addr %s234, 8
        %s236 = scalar_lea.vmem [#allocation2], %s235
        %p237 = pneg %p62
        %p238 = pneg %p59
        %s239 = sand.u32 %s77, 1
        %s240 = scalar_lea.sflag [#allocation6], %s239
        %s241 = sand.u32 %s77, 1
        %s242 = smul.addr %s241, 2
        %s243 = scalar_lea.vmem [#allocation5], %s242
        %p244 = pneg %p90
        %p245 = pneg %p87
        %p246 = pneg %p118
        %p247 = pneg %p115
        %s248 = sand.u32 %s105, 1
        %s249 = scalar_lea.sflag [#allocation4], %s248
        %s250 = sand.u32 %s105, 1
        %s251 = scalar_lea.vmem [#allocation7], %s250
        %p252 = pneg %p146
        %p253 = pneg %p143
        %s254 = sand.u32 %s133, 1
        %s255 = scalar_lea.sflag [#allocation9], %s254
        %s256 = sand.u32 %s133, 1
        %s257 = scalar_lea.vmem [#allocation8], %s256
        %s258 = smul.u32 2, %s32
        %s259 = smul.u32 2, %s32
        %s260 = sadd.s32 %s31, %s32
        %s261 = sadd.s32 %s31, %s32
        %v262 = vld [vmem:[%s218] sm:$0xff]
        %v263 = vld [vmem:[%s227] sm:$0x3]
        %v265 = vcombine.high %v262, %v262
        %vm267 = vcmask 1043456
        %v268 = vsel %vm267, %v262, -inf
        %v269 = vrot.slane %v268, 4
        %v270 = vmax.f32 %v268, %v269
        %v271 = vrot.slane %v270, 2
        %v272 = vmax.f32 %v270, %v271
        %v273 = vrot.slane %v272, 1
        %v274 = vmax.f32 %v272, %v273
        %v275 = vsel %vm267, %v265, -inf
        %v276 = vrot.slane %v275, 4
        %v277 = vmax.f32 %v275, %v276
        %v278 = vrot.slane %v277, 2
        %v279 = vmax.f32 %v277, %v278
        %v280 = vrot.slane %v279, 1
        %v281 = vmax.f32 %v279, %v280
        %v284 = vcombine.low %v274, %v281
        %v286 = vsub.f32 %v262, %v284
        %v287 = vmul.f32 %v286, 1.442695
        %v288 = vpow.pop %v287
        %v290 = vcombine.high %v288, %v288
        %v292 = vsel %vm267, %v288, 0.0
        %v293 = vrot.slane %v292, 4
        %v294 = vadd.f32 %v292, %v293
        %v295 = vrot.slane %v294, 2
        %v296 = vadd.f32 %v294, %v295
        %v297 = vrot.slane %v296, 1
        %v298 = vadd.f32 %v296, %v297
        %v299 = vsel %vm267, %v290, 0.0
        %v300 = vrot.slane %v299, 4
        %v301 = vadd.f32 %v299, %v300
        %v302 = vrot.slane %v301, 2
        %v303 = vadd.f32 %v301, %v302
        %v304 = vrot.slane %v303, 1
        %v305 = vadd.f32 %v303, %v304
        %v306 = vlaneseq
        %v307 = vshrl.u32 %v306, 7
        %v308 = vlaneseq
        %v309 = vshrl.u32 %v308, 7
        %v310 = vsub.s32 0, %v309
        %v311 = vrot.slane %v263, %v310
        %v312 = vlaneseq
        %v313 = vshrl.u32 %v312, 7
        %v314 = vsub.s32 1, %v313
        %v315 = vrot.slane %v263, %v314
        %vm316 = vcmp.eq.s32.totalorder %v307, %v311
        %vm317 = vcmp.eq.s32.totalorder %v307, %v315
        %v319 = vcombine.high %v286, %v286
        %v321 = vsel %vm316, %v286, 0.0
        %v322 = vsel %vm317, %v319, 0.0
        %v323 = vsel %vm267, %v321, 0.0
        %v324 = vrot.slane %v323, 4
        %v325 = vadd.f32 %v323, %v324
        %v326 = vrot.slane %v325, 2
        %v327 = vadd.f32 %v325, %v326
        %v328 = vrot.slane %v327, 1
        %v329 = vadd.f32 %v327, %v328
        %v330 = vsel %vm267, %v322, 0.0
        %v331 = vrot.slane %v330, 4
        %v332 = vadd.f32 %v330, %v331
        %v333 = vrot.slane %v332, 2
        %v334 = vadd.f32 %v332, %v333
        %v335 = vrot.slane %v334, 1
        %v336 = vadd.f32 %v334, %v335
        %v337 = vlog2.pop %v298
        %v338 = vmul.f32 %v337, 0.6931472
        %v339 = vlog2.pop %v305
        %v340 = vmul.f32 %v339, 0.6931472
        %v341 = vsub.f32 %v338, %v329
        %v342 = vsub.f32 %v340, %v336
        %vm343 = vcmp.ne.s32.totalorder %v263, 4294967295
        %v346 = vcombine.low %v341, %v342
        %v348 = vunpack.c.l.s4 1966171168
        %v349 = vunpack.c.0.s8 %v348
        %v350 = vlaneseq
        %v351 = vshrl.u32 %v350, 7
        %v352 = vsub.s32 %v349, %v351
        %v353 = vrot.slane %v346, %v352
        %v355 = vunpack.c.l.s4 1966171168
        %v356 = vunpack.c.0.s8 %v355
        %v357 = vlaneseq
        %v358 = vshrl.u32 %v357, 7
        %v359 = vsub.s32 %v356, %v358
        %v360 = vrot.slane %v353, %v359
        %v362 = vsel %vm343, %v360, 0.0
        %v364 = vlaneseq
        %v365 = vshrl.u32 %v364, 7
        %v366 = vsub.s32 0, %v365
        %v367 = vrot.slane %v362, %v366
        %v368 = vlaneseq
        %v369 = vshrl.u32 %v368, 7
        %v370 = vsub.s32 1, %v369
        %v371 = vrot.slane %v362, %v370
        %vm374 = vcmask 1040384
        %v375 = vsel %vm374, %v367, 0.0
        %v376 = vsel %vm374, %v371, 0.0
        %v377 = vadd.f32 %v375, %v376
        %378 = vadd.xlane.f32.xlu0 %v377
        %v379 = vpop.xlane.xlu0 %378
        %v380 = vrot.slane %v379, 4
        %v381 = vadd.f32 %v379, %v380
        %v382 = vrot.slane %v381, 2
        %v383 = vadd.f32 %v381, %v382
        %v384 = vrot.slane %v383, 1
        %v385 = vadd.f32 %v383, %v384
        %s386 = vtos %v385
        %v387 = vstv %s386
        %388 = vst [vmem:[%s251] sm:$0x1] %v387
        %v389 = vsel %vm343, 1, 0
        %v390 = vcvt.s32.f32 %v389
        %v392 = vlaneseq
        %v393 = vshrl.u32 %v392, 7
        %v394 = vsub.s32 0, %v393
        %v395 = vrot.slane %v390, %v394
        %v396 = vlaneseq
        %v397 = vshrl.u32 %v396, 7
        %v398 = vsub.s32 1, %v397
        %v399 = vrot.slane %v390, %v398
        %v402 = vsel %vm374, %v395, 0.0
        %v403 = vsel %vm374, %v399, 0.0
        %v404 = vadd.f32 %v402, %v403
        %405 = vadd.xlane.f32.xlu0 %v404
        %v406 = vpop.xlane.xlu0 %405
        %v407 = vrot.slane %v406, 4
        %v408 = vadd.f32 %v406, %v407
        %v409 = vrot.slane %v408, 2
        %v410 = vadd.f32 %v408, %v409
        %v411 = vrot.slane %v410, 1
        %v412 = vadd.f32 %v410, %v411
        %s413 = vtos %v412
        %v414 = vstv %s413
        %415 = vst [vmem:[%s257] sm:$0x1] %v414
        %s416 = sand.u32 %s105, 1
        %s417 = scalar_lea.sflag [#allocation4], %s416
        %s418 = sand.u32 %s105, 1
        %s419 = scalar_lea.vmem [#allocation7], %s418
        %s420 = sand.u32 %s133, 1
        %s421 = scalar_lea.sflag [#allocation9], %s420
        %s422 = sand.u32 %s133, 1
        %s423 = scalar_lea.vmem [#allocation8], %s422
        // Predicated region
        $region37: #{tpu_custom_call.1} parent=27 // pred_check
          %p424 = pneg %p115
        $region38: #{tpu_custom_call.1} parent=27 // pred_check_branch
          %426 = sbr.rel (%p424) target = $region40
        $region39: #{tpu_custom_call.1} parent=27 // pred_region
          %s427 = sadd.s32 %s31, %s32
          %s429 = ssub.s32 16, 16
          %430 = vsyncadd %s417, %s429
          %s431 = smul.addr %s427, 16
          %s432 = scalar_lea.hbm %s2, %s431
          %s434 = sshll.u32 %s419, 4
          %s435 = int_to_ptr.vmem [resolvable:$true] %s434
          %437 = dma.vmem_to_hbm [thread:$0]  %s435, 16, %s432, %s417
        $region40: #{tpu_custom_call.1} parent=27 // pred_fallthru
          _
        // Predicated region
        $region41: #{tpu_custom_call.1} parent=27 // pred_check
          %p438 = pneg %p143
        $region42: #{tpu_custom_call.1} parent=27 // pred_check_branch
          %440 = sbr.rel (%p438) target = $region44
        $region43: #{tpu_custom_call.1} parent=27 // pred_region
          %s441 = sadd.s32 %s31, %s32
          %s443 = ssub.s32 16, 16
          %444 = vsyncadd %s421, %s443
          %s445 = smul.addr %s441, 16
          %s446 = scalar_lea.hbm %s3, %s445
          %s448 = sshll.u32 %s423, 4
          %s449 = int_to_ptr.vmem [resolvable:$true] %s448
          %451 = dma.vmem_to_hbm [thread:$0]  %s449, 16, %s446, %s421
        $region44: #{tpu_custom_call.1} parent=27 // pred_fallthru
          _
      $region28: #{tpu_custom_call.1} parent=5 // pred_fallthru
        _
      %p452 = scmp.le.s32.totalorder 2, %s22
      // Predicated region
      $region45: #{tpu_custom_call.1} parent=5 // pred_check
        %p453 = pneg %p452
      $region46: #{tpu_custom_call.1} parent=5 // pred_check_branch
        %455 = sbr.rel (%p453) target = $region48
      $region47: #{tpu_custom_call.1} parent=5 // pred_region
        %s456 = ssub.s32 %s22, 2
        // Predicated region
        $region49: #{tpu_custom_call.1} parent=47 // pred_check
          %p457 = pneg %p121
        $region50: #{tpu_custom_call.1} parent=47 // pred_check_branch
          %459 = sbr.rel (%p457) target = $region52
        $region51: #{tpu_custom_call.1} parent=47 // pred_region
          %s460 = sand.u32 %s106, 1
          %s461 = scalar_lea.sflag [#allocation4], %s460
          %s462 = sand.u32 %s106, 1
          %s463 = scalar_lea.vmem [#allocation7], %s462
          %464 = dma.done %s461, 16
        $region52: #{tpu_custom_call.1} parent=47 // pred_fallthru
          _
        // Predicated region
        $region53: #{tpu_custom_call.1} parent=47 // pred_check
          %p465 = pneg %p149
        $region54: #{tpu_custom_call.1} parent=47 // pred_check_branch
          %467 = sbr.rel (%p465) target = $region56
        $region55: #{tpu_custom_call.1} parent=47 // pred_region
          %s468 = sand.u32 %s134, 1
          %s469 = scalar_lea.sflag [#allocation9], %s468
          %s470 = sand.u32 %s134, 1
          %s471 = scalar_lea.vmem [#allocation8], %s470
          %472 = dma.done %s469, 16
        $region56: #{tpu_custom_call.1} parent=47 // pred_fallthru
          _
      $region48: #{tpu_custom_call.1} parent=5 // pred_fallthru
        _
    $region6: #{tpu_custom_call.1} parent=1 // loop_footer
      %s26 = sadd.s32 1, %s22
    $region7: #{tpu_custom_call.1} parent=1 // loop_footer_branch
      %21 = sbr.rel target = $region3
    $region8: #{tpu_custom_call.1} parent=1 // loop_exit
      _
    %473 = vsyncpa [#allocation3], 1
    %s474 = scalar_lea.sflag [#allocation3], 1
    %475 = vsyncpa %s474, 1
    %476 = vsyncpa [#allocation6], 1
    %s477 = scalar_lea.sflag [#allocation6], 1
    %478 = vsyncpa %s477, 1
    %479 = vsyncpa [#allocation4], 1
    %s480 = scalar_lea.sflag [#allocation4], 1
    %481 = vsyncpa %s480, 1
    %482 = vsyncpa [#allocation9], 1
    %s483 = scalar_lea.sflag [#allocation9], 1
    %484 = vsyncpa %s483, 1

</llo_original>
